<compile_context>
chip_gen: v7x
topology: tpu7x:2x2x1
jax: 0.10.0
libtpu: 0.0.40
codegen_flags: <defaults>
</compile_context>

<pallas_src>
import functools

import jax
import jax.numpy as jnp
from jax.experimental import pallas as pl
from jax.experimental.pallas import tpu as pltpu


def _round_up(x, m):
    return (x + m - 1) // m * m


def residual_stack_kernel(x_ref, kp_ref, kn_ref, w1_ref, b1_ref, w2_ref,
                          b2_ref, out_ref, *, n_real_c, packed_taps):
    """One row tile (= whole sequences) of the full residual stack.

    Ref shapes (channel dims lane-padded to multiples of 128):
      x_ref  : (rows, Cp)   f32   input activations (rows = folded N, L)
      kp_ref : (rows, 1)    f32   1.0 except 0.0 at the first step of each seq
      kn_ref : (rows, 1)    f32   1.0 except 0.0 at the last step of each seq
      w1_ref : packed : (layers, Cp, RHp)    bf16  taps at lane offsets 0/C/2C
               general: (layers, 3, Cp, RHp) bf16  taps (prev, center, next)
      b1_ref : (layers, 1, RHp)  f32
      w2_ref : (layers, RHp, Cp) bf16  1x1 conv, (in, out)
      b2_ref : (layers, 1, Cp)   f32
      out_ref: (rows, Cp)   f32
    """
    rows, _ = out_ref.shape
    n_layers = w1_ref.shape[0]

    keep_prev = kp_ref[...]          # (rows, 1): broadcasts along lanes
    keep_next = kn_ref[...]

    carry = x_ref[...]               # f32 residual carry (local; stored once)

    # Static unroll is right for the 2-4 layers this module uses; switch to a
    # lax.fori_loop over layers (dynamic w1_ref[li]) if n_layers grows.
    for li in range(n_layers):
        h = jnp.maximum(carry, 0.0)                          # relu_1 (f32)
        # Shifted taps via XLU row rolls. Wrap-around rows are exactly the
        # masked ones, so multiplying by the (rows, 1) keep masks reproduces
        # zero-padded conv taps.
        h_prev = pltpu.roll(h, shift=1, axis=0) * keep_prev
        h_next = pltpu.roll(h, shift=rows - 1, axis=0) * keep_next

        if packed_taps:
            # 3*C <= Cp: pack the three taps into one lane-dense K dimension.
            # Padding lanes of h are exactly zero, so the adds are exact.
            packed = (h
                      + pltpu.roll(h_prev, shift=n_real_c, axis=1)
                      + pltpu.roll(h_next, shift=2 * n_real_c, axis=1))
            y = jnp.dot(packed.astype(jnp.bfloat16), w1_ref[li],
                        preferred_element_type=jnp.float32)
        else:
            # General path: three K=Cp matmuls accumulated in f32 (no concat).
            y = jnp.dot(h_prev.astype(jnp.bfloat16), w1_ref[li, 0],
                        preferred_element_type=jnp.float32)
            y = y + jnp.dot(h.astype(jnp.bfloat16), w1_ref[li, 1],
                            preferred_element_type=jnp.float32)
            y = y + jnp.dot(h_next.astype(jnp.bfloat16), w1_ref[li, 2],
                            preferred_element_type=jnp.float32)

        y = jnp.maximum(y + b1_ref[li], 0.0)                 # bias + relu_2
        z = jnp.dot(y.astype(jnp.bfloat16), w2_ref[li],
                    preferred_element_type=jnp.float32) + b2_ref[li]
        carry = carry + z                                    # residual add

    out_ref[...] = jnp.maximum(carry, 0.0)                   # final stack relu


def pack_residual_stack_params(w1, b1, w2, b2, cp, rhp):
    """Repack PyTorch Conv1d parameters for the kernel.
    In a real model this runs once per parameter set (hoisted / cached),
    not once per forward call."""
    n_layers, rh, c, k = w1.shape
    assert k == 3
    packed = (3 * c) <= cp
    if packed:
        # Taps stacked along K at lane offsets 0 (center), C (prev), 2C (next).
        taps = jnp.stack([w1[..., 1], w1[..., 0], w1[..., 2]], axis=1)  # (L,3,RH,C)
        taps = jnp.transpose(taps, (0, 1, 3, 2))                        # (L,3,C,RH)
        w1_k = taps.reshape(n_layers, 3 * c, rh)
        w1_k = jnp.pad(w1_k, ((0, 0), (0, cp - 3 * c), (0, rhp - rh)))
    else:
        taps = jnp.transpose(w1, (0, 3, 2, 1))                          # (L,3,C,RH)
        w1_k = jnp.pad(taps, ((0, 0), (0, 0), (0, cp - c), (0, rhp - rh)))
    w1_k = w1_k.astype(jnp.bfloat16)
    b1_k = jnp.pad(b1, ((0, 0), (0, rhp - rh))).reshape(n_layers, 1, rhp)
    b1_k = b1_k.astype(jnp.float32)
    w2_k = jnp.pad(jnp.transpose(w2, (0, 2, 1)),
                   ((0, 0), (0, rhp - rh), (0, cp - c))).astype(jnp.bfloat16)
    b2_k = jnp.pad(b2, ((0, 0), (0, cp - c))).reshape(n_layers, 1, cp)
    b2_k = b2_k.astype(jnp.float32)
    return packed, w1_k, b1_k, w2_k, b2_k


@functools.partial(jax.jit, static_argnames=("target_tile_rows",))
def residual_stack_pallas(x_nlc, w1, b1, w2, b2, *, target_tile_rows=2048):
    """x_nlc: (N, L, C) activations (channels-last).
    w1: (layers, RH, C, 3)  PyTorch Conv1d weight layout (kernel_size=3, pad=1)
    b1: (layers, RH)
    w2: (layers, C, RH)     PyTorch Conv1d weight (out, in, 1), squeezed
    b2: (layers, C)
    """
    N, L, C = x_nlc.shape
    Cp = _round_up(C, 128)
    RHp = _round_up(w1.shape[1], 128)

    packed, w1_k, b1_k, w2_k, b2_k = pack_residual_stack_params(
        w1, b1, w2, b2, Cp, RHp)

    # Whole sequences per row tile.  Multi-hundred-row tiles fill the MXU on
    # v6e/v7x while staying far below v7x's 64 MiB VMEM.
    if L % 8 == 0:
        tn = max(1, min(N, max(1, target_tile_rows // L)))
    else:
        tn = N          # single full-array block (exempt from (8,128) rule)
    n_pad = _round_up(N, tn)
    num_tiles = n_pad // tn
    tile_rows = tn * L
    rows = n_pad * L

    # Lane-dense channel padding (padded lanes stay exactly zero through every
    # layer because padded weights/biases are zero); batch padded to a whole
    # number of tiles; (N, L) folded into rows.
    x_p = jnp.pad(x_nlc.astype(jnp.float32),
                  ((0, n_pad - N), (0, 0), (0, Cp - C))).reshape(rows, Cp)

    # (rows, 1) multiplicative boundary masks (first / last step of each seq).
    pos = jnp.arange(rows, dtype=jnp.int32) % L
    keep_prev = (pos != 0).astype(jnp.float32).reshape(rows, 1)
    keep_next = (pos != (L - 1)).astype(jnp.float32).reshape(rows, 1)

    kernel = functools.partial(residual_stack_kernel,
                               n_real_c=C, packed_taps=packed)
    w1_idx = ((lambda i: (0, 0, 0)) if w1_k.ndim == 3
              else (lambda i: (0, 0, 0, 0)))

    out2 = pl.pallas_call(
        kernel,
        out_shape=jax.ShapeDtypeStruct((rows, Cp), jnp.float32),
        grid_spec=pltpu.PrefetchScalarGridSpec(
            num_scalar_prefetch=0,
            grid=(num_tiles,),
            in_specs=[
                pl.BlockSpec((tile_rows, Cp), lambda i: (i, 0)),
                pl.BlockSpec((tile_rows, 1), lambda i: (i, 0)),
                pl.BlockSpec((tile_rows, 1), lambda i: (i, 0)),
                pl.BlockSpec(w1_k.shape, w1_idx),              # resident weights
                pl.BlockSpec(b1_k.shape, lambda i: (0, 0, 0)),
                pl.BlockSpec(w2_k.shape, lambda i: (0, 0, 0)),
                pl.BlockSpec(b2_k.shape, lambda i: (0, 0, 0)),
            ],
            out_specs=pl.BlockSpec((tile_rows, Cp), lambda i: (i, 0)),
        ),
        compiler_params=pltpu.CompilerParams(
            dimension_semantics=("parallel",),
            vmem_limit_bytes=32 * 1024 * 1024),
        input_output_aliases={0: 0},
    )(x_p, keep_prev, keep_next, w1_k, b1_k, w2_k, b2_k)

    return out2.reshape(n_pad, L, Cp)[:N, :, :C]


def residual_stack_reference(x_nlc, w1, b1, w2, b2):
    """Pure-JAX reference mirroring the kernel math (bf16 matmul inputs,
    f32 accumulation / residual carry)."""
    N, L, C = x_nlc.shape
    n_layers, RH, _, _ = w1.shape
    acc = x_nlc.astype(jnp.float32)
    for li in range(n_layers):
        h = jnp.maximum(acc, 0.0)
        h_pad = jnp.pad(h, ((0, 0), (1, 1), (0, 0)))
        taps = jnp.concatenate([h_pad[:, k:k + L, :] for k in range(3)], axis=-1)
        w1_t = jnp.transpose(w1[li], (2, 1, 0)).reshape(3 * C, RH)   # tap-major
        y = jnp.einsum("nlk,kr->nlr",
                       taps.astype(jnp.bfloat16), w1_t.astype(jnp.bfloat16),
                       preferred_element_type=jnp.float32) + b1[li][None, None, :]
        y = jnp.maximum(y, 0.0)
        z = jnp.einsum("nlr,rc->nlc",
                       y.astype(jnp.bfloat16),
                       jnp.transpose(w2[li]).astype(jnp.bfloat16),
                       preferred_element_type=jnp.float32) + b2[li][None, None, :]
        acc = acc + z
    return jnp.maximum(acc, 0.0)


if __name__ == "__main__":
    # Small, module-consistent shapes: in_channels == num_hiddens == hidden_dim
    # and num_residual_hiddens = hidden_dim * 1.
    N = 2             # batch
    C = 32            # in_channels == num_hiddens
    L = 16            # sequence length
    RH = 32           # num_residual_hiddens (= hidden_dim in the module)
    NUM_LAYERS = 2    # num_residual_layers

    key = jax.random.PRNGKey(0)
    kx, kw1, kb1, kw2, kb2 = jax.random.split(key, 5)

    # Input in PyTorch NCW layout, transposed to kernel NLC layout.
    x_ncw = jax.random.normal(kx, (N, C, L), dtype=jnp.float32)
    x_nlc = jnp.transpose(x_ncw, (0, 2, 1))

    # Deterministic synthetic parameters (PyTorch Conv1d weight shapes):
    #   conv1.weight: (RH, C, 3), conv1.bias: (RH,)
    #   conv2.weight: (C, RH, 1) -> stored squeezed as (C, RH), conv2.bias: (C,)
    w1 = 0.1 * jax.random.normal(kw1, (NUM_LAYERS, RH, C, 3), dtype=jnp.float32)
    b1 = 0.1 * jax.random.normal(kb1, (NUM_LAYERS, RH), dtype=jnp.float32)
    w2 = 0.1 * jax.random.normal(kw2, (NUM_LAYERS, C, RH), dtype=jnp.float32)
    b2 = 0.1 * jax.random.normal(kb2, (NUM_LAYERS, C), dtype=jnp.float32)

    out_nlc = residual_stack_pallas(x_nlc, w1, b1, w2, b2)
    out_nlc = jax.block_until_ready(out_nlc)

    ref_nlc = residual_stack_reference(x_nlc, w1, b1, w2, b2)
    assert out_nlc.shape == (N, L, C)
    assert jnp.allclose(out_nlc, ref_nlc, atol=1e-3, rtol=1e-3), "mismatch vs reference"

    # Back to PyTorch NCW layout if desired: (N, C, L)
    _ = jnp.transpose(out_nlc, (0, 2, 1))

    # TODO(synk): the surrounding VAE (strided conv encoder, ConvTranspose1d
    # decoder, Linear heads, reparameterization sampling, losses) is left to
    # standard JAX/XLA; only the ResidualStack is a Pallas kernel here.
    print("KERNEL_OK")
</pallas_src>

<mosaic_0001>
module attributes {stable_mosaic.version = 11 : i64} {
  func.func @residual_stack_kernel(%arg0: i32, %arg1: memref<32x128xf32, #tpu.memory_space<vmem>>, %arg2: memref<32x1xf32, #tpu.memory_space<vmem>>, %arg3: memref<32x1xf32, #tpu.memory_space<vmem>>, %arg4: memref<2x128x128xbf16, #tpu.memory_space<vmem>>, %arg5: memref<2x1x128xf32, #tpu.memory_space<vmem>>, %arg6: memref<2x128x128xbf16, #tpu.memory_space<vmem>>, %arg7: memref<2x1x128xf32, #tpu.memory_space<vmem>>, %arg8: memref<32x128xf32, #tpu.memory_space<vmem>>) attributes {dimension_semantics = [#tpu.dimension_semantics<parallel>], iteration_bounds = array<i64: 1>, scalar_prefetch = 0 : i64, scratch_operands = 0 : i64, tpu.core_type = #tpu.core_type<tc>, window_params = [{transform_indices = @transform_0, window_bounds = array<i64: 32, 128>}, {transform_indices = @transform_1, window_bounds = array<i64: 32, 1>}, {transform_indices = @transform_2, window_bounds = array<i64: 32, 1>}, {pipeline_mode = #tpu.pipeline_mode<synchronous>, transform_indices = @transform_3, window_bounds = array<i64: 2, 128, 128>}, {pipeline_mode = #tpu.pipeline_mode<synchronous>, transform_indices = @transform_4, window_bounds = array<i64: 2, 1, 128>}, {pipeline_mode = #tpu.pipeline_mode<synchronous>, transform_indices = @transform_5, window_bounds = array<i64: 2, 128, 128>}, {pipeline_mode = #tpu.pipeline_mode<synchronous>, transform_indices = @transform_6, window_bounds = array<i64: 2, 1, 128>}, {transform_indices = @transform_7, window_bounds = array<i64: 32, 128>}]} {
    %c0 = arith.constant 0 : index
    %c0_0 = arith.constant 0 : index
    %0 = vector.load %arg2[%c0, %c0_0] : memref<32x1xf32, #tpu.memory_space<vmem>>, vector<32x1xf32>
    %c0_1 = arith.constant 0 : index
    %c0_2 = arith.constant 0 : index
    %1 = vector.load %arg3[%c0_1, %c0_2] : memref<32x1xf32, #tpu.memory_space<vmem>>, vector<32x1xf32>
    %c0_3 = arith.constant 0 : index
    %c0_4 = arith.constant 0 : index
    %2 = vector.load %arg1[%c0_3, %c0_4] : memref<32x128xf32, #tpu.memory_space<vmem>>, vector<32x128xf32>
    %cst = arith.constant 0.000000e+00 : f32
    %3 = vector.broadcast %cst : f32 to vector<32x128xf32>
    %4 = arith.maximumf %2, %3 : vector<32x128xf32>
    %c1_i32 = arith.constant 1 : i32
    %5 = tpu.dynamic_rotate %4 by %c1_i32 dim 0 : vector<32x128xf32>, i32 -> vector<32x128xf32>
    %6 = vector.broadcast %0 : vector<32x1xf32> to vector<32x128xf32>
    %7 = arith.mulf %5, %6 : vector<32x128xf32>
    %c31_i32 = arith.constant 31 : i32
    %8 = tpu.dynamic_rotate %4 by %c31_i32 dim 0 : vector<32x128xf32>, i32 -> vector<32x128xf32>
    %9 = vector.broadcast %1 : vector<32x1xf32> to vector<32x128xf32>
    %10 = arith.mulf %8, %9 : vector<32x128xf32>
    %c32_i32 = arith.constant 32 : i32
    %11 = tpu.dynamic_rotate %7 by %c32_i32 dim 1 : vector<32x128xf32>, i32 -> vector<32x128xf32>
    %12 = arith.addf %4, %11 : vector<32x128xf32>
    %c64_i32 = arith.constant 64 : i32
    %13 = tpu.dynamic_rotate %10 by %c64_i32 dim 1 : vector<32x128xf32>, i32 -> vector<32x128xf32>
    %14 = arith.addf %12, %13 : vector<32x128xf32>
    %15 = arith.truncf %14 : vector<32x128xf32> to vector<32x128xbf16>
    %c0_5 = arith.constant 0 : index
    %c0_6 = arith.constant 0 : index
    %c0_7 = arith.constant 0 : index
    %16 = vector.load %arg4[%c0_5, %c0_6, %c0_7] : memref<2x128x128xbf16, #tpu.memory_space<vmem>>, vector<1x128x128xbf16>
    %17 = vector.shape_cast %16 : vector<1x128x128xbf16> to vector<128x128xbf16>
    %cst_8 = arith.constant dense<0.000000e+00> : vector<32x128xf32>
    %18 = tpu.matmul %15, %17, %cst_8 {dimension_numbers = #tpu.dot_dimension_numbers<[1], [0], [0], [1], [0, 0, 1, 1], [], []>} : vector<32x128xbf16>, vector<128x128xbf16>, vector<32x128xf32> -> vector<32x128xf32>
    %c0_9 = arith.constant 0 : index
    %c0_10 = arith.constant 0 : index
    %c0_11 = arith.constant 0 : index
    %19 = vector.load %arg5[%c0_9, %c0_10, %c0_11] : memref<2x1x128xf32, #tpu.memory_space<vmem>>, vector<1x1x128xf32>
    %20 = vector.shape_cast %19 : vector<1x1x128xf32> to vector<1x128xf32>
    %21 = vector.broadcast %20 : vector<1x128xf32> to vector<32x128xf32>
    %22 = arith.addf %18, %21 : vector<32x128xf32>
    %cst_12 = arith.constant 0.000000e+00 : f32
    %23 = vector.broadcast %cst_12 : f32 to vector<32x128xf32>
    %24 = arith.maximumf %22, %23 : vector<32x128xf32>
    %25 = arith.truncf %24 : vector<32x128xf32> to vector<32x128xbf16>
    %c0_13 = arith.constant 0 : index
    %c0_14 = arith.constant 0 : index
    %c0_15 = arith.constant 0 : index
    %26 = vector.load %arg6[%c0_13, %c0_14, %c0_15] : memref<2x128x128xbf16, #tpu.memory_space<vmem>>, vector<1x128x128xbf16>
    %27 = vector.shape_cast %26 : vector<1x128x128xbf16> to vector<128x128xbf16>
    %cst_16 = arith.constant dense<0.000000e+00> : vector<32x128xf32>
    %28 = tpu.matmul %25, %27, %cst_16 {dimension_numbers = #tpu.dot_dimension_numbers<[1], [0], [0], [1], [0, 0, 1, 1], [], []>} : vector<32x128xbf16>, vector<128x128xbf16>, vector<32x128xf32> -> vector<32x128xf32>
    %c0_17 = arith.constant 0 : index
    %c0_18 = arith.constant 0 : index
    %c0_19 = arith.constant 0 : index
    %29 = vector.load %arg7[%c0_17, %c0_18, %c0_19] : memref<2x1x128xf32, #tpu.memory_space<vmem>>, vector<1x1x128xf32>
    %30 = vector.shape_cast %29 : vector<1x1x128xf32> to vector<1x128xf32>
    %31 = vector.broadcast %30 : vector<1x128xf32> to vector<32x128xf32>
    %32 = arith.addf %28, %31 : vector<32x128xf32>
    %33 = arith.addf %2, %32 : vector<32x128xf32>
    %cst_20 = arith.constant 0.000000e+00 : f32
    %34 = vector.broadcast %cst_20 : f32 to vector<32x128xf32>
    %35 = arith.maximumf %33, %34 : vector<32x128xf32>
    %c1_i32_21 = arith.constant 1 : i32
    %36 = tpu.dynamic_rotate %35 by %c1_i32_21 dim 0 : vector<32x128xf32>, i32 -> vector<32x128xf32>
    %37 = vector.broadcast %0 : vector<32x1xf32> to vector<32x128xf32>
    %38 = arith.mulf %36, %37 : vector<32x128xf32>
    %c31_i32_22 = arith.constant 31 : i32
    %39 = tpu.dynamic_rotate %35 by %c31_i32_22 dim 0 : vector<32x128xf32>, i32 -> vector<32x128xf32>
    %40 = vector.broadcast %1 : vector<32x1xf32> to vector<32x128xf32>
    %41 = arith.mulf %39, %40 : vector<32x128xf32>
    %c32_i32_23 = arith.constant 32 : i32
    %42 = tpu.dynamic_rotate %38 by %c32_i32_23 dim 1 : vector<32x128xf32>, i32 -> vector<32x128xf32>
    %43 = arith.addf %35, %42 : vector<32x128xf32>
    %c64_i32_24 = arith.constant 64 : i32
    %44 = tpu.dynamic_rotate %41 by %c64_i32_24 dim 1 : vector<32x128xf32>, i32 -> vector<32x128xf32>
    %45 = arith.addf %43, %44 : vector<32x128xf32>
    %46 = arith.truncf %45 : vector<32x128xf32> to vector<32x128xbf16>
    %c1 = arith.constant 1 : index
    %c0_25 = arith.constant 0 : index
    %c0_26 = arith.constant 0 : index
    %47 = vector.load %arg4[%c1, %c0_25, %c0_26] : memref<2x128x128xbf16, #tpu.memory_space<vmem>>, vector<1x128x128xbf16>
    %48 = vector.shape_cast %47 : vector<1x128x128xbf16> to vector<128x128xbf16>
    %cst_27 = arith.constant dense<0.000000e+00> : vector<32x128xf32>
    %49 = tpu.matmul %46, %48, %cst_27 {dimension_numbers = #tpu.dot_dimension_numbers<[1], [0], [0], [1], [0, 0, 1, 1], [], []>} : vector<32x128xbf16>, vector<128x128xbf16>, vector<32x128xf32> -> vector<32x128xf32>
    %c1_28 = arith.constant 1 : index
    %c0_29 = arith.constant 0 : index
    %c0_30 = arith.constant 0 : index
    %50 = vector.load %arg5[%c1_28, %c0_29, %c0_30] : memref<2x1x128xf32, #tpu.memory_space<vmem>>, vector<1x1x128xf32>
    %51 = vector.shape_cast %50 : vector<1x1x128xf32> to vector<1x128xf32>
    %52 = vector.broadcast %51 : vector<1x128xf32> to vector<32x128xf32>
    %53 = arith.addf %49, %52 : vector<32x128xf32>
    %cst_31 = arith.constant 0.000000e+00 : f32
    %54 = vector.broadcast %cst_31 : f32 to vector<32x128xf32>
    %55 = arith.maximumf %53, %54 : vector<32x128xf32>
    %56 = arith.truncf %55 : vector<32x128xf32> to vector<32x128xbf16>
    %c1_32 = arith.constant 1 : index
    %c0_33 = arith.constant 0 : index
    %c0_34 = arith.constant 0 : index
    %57 = vector.load %arg6[%c1_32, %c0_33, %c0_34] : memref<2x128x128xbf16, #tpu.memory_space<vmem>>, vector<1x128x128xbf16>
    %58 = vector.shape_cast %57 : vector<1x128x128xbf16> to vector<128x128xbf16>
    %cst_35 = arith.constant dense<0.000000e+00> : vector<32x128xf32>
    %59 = tpu.matmul %56, %58, %cst_35 {dimension_numbers = #tpu.dot_dimension_numbers<[1], [0], [0], [1], [0, 0, 1, 1], [], []>} : vector<32x128xbf16>, vector<128x128xbf16>, vector<32x128xf32> -> vector<32x128xf32>
    %c1_36 = arith.constant 1 : index
    %c0_37 = arith.constant 0 : index
    %c0_38 = arith.constant 0 : index
    %60 = vector.load %arg7[%c1_36, %c0_37, %c0_38] : memref<2x1x128xf32, #tpu.memory_space<vmem>>, vector<1x1x128xf32>
    %61 = vector.shape_cast %60 : vector<1x1x128xf32> to vector<1x128xf32>
    %62 = vector.broadcast %61 : vector<1x128xf32> to vector<32x128xf32>
    %63 = arith.addf %59, %62 : vector<32x128xf32>
    %64 = arith.addf %33, %63 : vector<32x128xf32>
    %cst_39 = arith.constant 0.000000e+00 : f32
    %65 = vector.broadcast %cst_39 : f32 to vector<32x128xf32>
    %66 = arith.maximumf %64, %65 : vector<32x128xf32>
    %c0_40 = arith.constant 0 : index
    %c0_41 = arith.constant 0 : index
    %67 = vector.load %arg8[%c0_40, %c0_41] : memref<32x128xf32, #tpu.memory_space<vmem>>, vector<32x128xf32>
    tpu.vector_store %arg8[%c0_40, %c0_41], %66 {strides = array<i32>} : memref<32x128xf32, #tpu.memory_space<vmem>>, vector<32x128xf32>,
    return
  }
  func.func @transform_0(%arg0: i32) -> (i32, i32) {
    %c0_i32 = arith.constant 0 : i32
    %c0_i32_0 = arith.constant 0 : i32
    return %arg0, %c0_i32 : i32, i32
  }
  func.func @transform_1(%arg0: i32) -> (i32, i32) {
    %c0_i32 = arith.constant 0 : i32
    %c0_i32_0 = arith.constant 0 : i32
    return %arg0, %c0_i32 : i32, i32
  }
  func.func @transform_2(%arg0: i32) -> (i32, i32) {
    %c0_i32 = arith.constant 0 : i32
    %c0_i32_0 = arith.constant 0 : i32
    return %arg0, %c0_i32 : i32, i32
  }
  func.func @transform_3(%arg0: i32) -> (i32, i32, i32) {
    %c0_i32 = arith.constant 0 : i32
    %c0_i32_0 = arith.constant 0 : i32
    %c0_i32_1 = arith.constant 0 : i32
    %c0_i32_2 = arith.constant 0 : i32
    return %c0_i32, %c0_i32_0, %c0_i32_1 : i32, i32, i32
  }
  func.func @transform_4(%arg0: i32) -> (i32, i32, i32) {
    %c0_i32 = arith.constant 0 : i32
    %c0_i32_0 = arith.constant 0 : i32
    %c0_i32_1 = arith.constant 0 : i32
    %c0_i32_2 = arith.constant 0 : i32
    return %c0_i32, %c0_i32_0, %c0_i32_1 : i32, i32, i32
  }
  func.func @transform_5(%arg0: i32) -> (i32, i32, i32) {
    %c0_i32 = arith.constant 0 : i32
    %c0_i32_0 = arith.constant 0 : i32
    %c0_i32_1 = arith.constant 0 : i32
    %c0_i32_2 = arith.constant 0 : i32
    return %c0_i32, %c0_i32_0, %c0_i32_1 : i32, i32, i32
  }
  func.func @transform_6(%arg0: i32) -> (i32, i32, i32) {
    %c0_i32 = arith.constant 0 : i32
    %c0_i32_0 = arith.constant 0 : i32
    %c0_i32_1 = arith.constant 0 : i32
    %c0_i32_2 = arith.constant 0 : i32
    return %c0_i32, %c0_i32_0, %c0_i32_1 : i32, i32, i32
  }
  func.func @transform_7(%arg0: i32) -> (i32, i32) {
    %c0_i32 = arith.constant 0 : i32
    %c0_i32_0 = arith.constant 0 : i32
    return %arg0, %c0_i32 : i32, i32
  }
}

</mosaic_0001>

<llo_original>
// kernel: residual_stack_pallas.1
$region0: #{residual_stack_pallas.1}
  #allocation0 [shape = 'u32[]', space=smem, size = 0x4, offset = 0x4, fixed_abs, tag = 'smem constant byte address 0x4 - core index']
  #allocation1 [shape = 'u32[144,128]{1,0:T(1,128)}', space=vmem, size = 0x12000, scoped, tag = 'internal scratch']
  %s0 = inlined_call_operand.vmem [shape: f32[32,128], index: 0, kind: input, shape index: {}, may-alias: {0,7}]
  %s1 = inlined_call_operand.vmem [shape: f32[32,1], index: 1, kind: input, shape index: {}]
  %s2 = inlined_call_operand.vmem [shape: f32[32,1], index: 2, kind: input, shape index: {}]
  %s3 = inlined_call_operand.vmem [shape: bf16[2,128,128], index: 3, kind: input, shape index: {}]
  %s4 = inlined_call_operand.vmem [shape: f32[2,1,128], index: 4, kind: input, shape index: {}]
  %s5 = inlined_call_operand.vmem [shape: bf16[2,128,128], index: 5, kind: input, shape index: {}]
  %s6 = inlined_call_operand.vmem [shape: f32[2,1,128], index: 6, kind: input, shape index: {}]
  %s7 = inlined_call_operand.vmem [shape: f32[32,128], index: 7, kind: output, shape index: {}, may-alias: {0,7}]
  %s8 = sld [smem:[#allocation0]]
  $region38: #{residual_stack_pallas.1} parent=0
    _
  %s10 = ssub.s32 1, %s8
  %s11 = scalar_select 0, %s10, %s8
  // Predicated region
  $region2: #{residual_stack_pallas.1} parent=0 // pred_check
    _
  $region3: #{residual_stack_pallas.1} parent=0 // pred_check_branch
    %13 = sbr.rel (0) target = $region5
  $region4: #{residual_stack_pallas.1} parent=0 // pred_region
    _
  $region5: #{residual_stack_pallas.1} parent=0 // pred_fallthru
    _
  // Predicated region
  $region6: #{residual_stack_pallas.1} parent=0 // pred_check
    _
  $region7: #{residual_stack_pallas.1} parent=0 // pred_check_branch
    %15 = sbr.rel (0) target = $region9
  $region8: #{residual_stack_pallas.1} parent=0 // pred_region
    _
  $region9: #{residual_stack_pallas.1} parent=0 // pred_fallthru
    _
  // Predicated region
  $region10: #{residual_stack_pallas.1} parent=0 // pred_check
    _
  $region11: #{residual_stack_pallas.1} parent=0 // pred_check_branch
    %17 = sbr.rel (0) target = $region13
  $region12: #{residual_stack_pallas.1} parent=0 // pred_region
    _
  $region13: #{residual_stack_pallas.1} parent=0 // pred_fallthru
    _
  // Predicated region
  $region14: #{residual_stack_pallas.1} parent=0 // pred_check
    _
  $region15: #{residual_stack_pallas.1} parent=0 // pred_check_branch
    %19 = sbr.rel (0) target = $region17
  $region16: #{residual_stack_pallas.1} parent=0 // pred_region
    _
  $region17: #{residual_stack_pallas.1} parent=0 // pred_fallthru
    _
  // Predicated region
  $region18: #{residual_stack_pallas.1} parent=0 // pred_check
    _
  $region19: #{residual_stack_pallas.1} parent=0 // pred_check_branch
    %21 = sbr.rel (0) target = $region21
  $region20: #{residual_stack_pallas.1} parent=0 // pred_region
    _
  $region21: #{residual_stack_pallas.1} parent=0 // pred_fallthru
    _
  // Predicated region
  $region22: #{residual_stack_pallas.1} parent=0 // pred_check
    _
  $region23: #{residual_stack_pallas.1} parent=0 // pred_check_branch
    %23 = sbr.rel (0) target = $region25
  $region24: #{residual_stack_pallas.1} parent=0 // pred_region
    _
  $region25: #{residual_stack_pallas.1} parent=0 // pred_fallthru
    _
  // Predicated region
  $region26: #{residual_stack_pallas.1} parent=0 // pred_check
    _
  $region27: #{residual_stack_pallas.1} parent=0 // pred_check_branch
    %25 = sbr.rel (0) target = $region29
  $region28: #{residual_stack_pallas.1} parent=0 // pred_region
    _
  $region29: #{residual_stack_pallas.1} parent=0 // pred_fallthru
    _
  %v27 = vld [vmem:[%s1] sm:$0xff]
  %v28 = vld [vmem:[%s1 + $0x8] sm:$0xff]
  %v29 = vld [vmem:[%s1 + $0x10] sm:$0xff]
  %v30 = vld [vmem:[%s1 + $0x18] sm:$0xff]
  %v31 = vld [vmem:[%s2] sm:$0xff]
  %v32 = vld [vmem:[%s2 + $0x8] sm:$0xff]
  %v33 = vld [vmem:[%s2 + $0x10] sm:$0xff]
  %v34 = vld [vmem:[%s2 + $0x18] sm:$0xff]
  %v35 = vld [vmem:[%s0] sm:$0xff]
  %v36 = vld [vmem:[%s0 + $0x8] sm:$0xff]
  %v37 = vld [vmem:[%s0 + $0x10] sm:$0xff]
  %v38 = vld [vmem:[%s0 + $0x18] sm:$0xff]
  %v39 = vmax.f32 %v35, 0.0
  %v40 = vmax.f32 %v36, 0.0
  %v41 = vmax.f32 %v37, 0.0
  %v42 = vmax.f32 %v38, 0.0
  %v43 = vrot.slane %v39, 7
  %v44 = vrot.slane %v40, 7
  %v45 = vrot.slane %v41, 7
  %v46 = vrot.slane %v42, 7
  %v47 = vlaneseq
  %v48 = vshrl.u32 %v47, 7
  %vm49 = vcmp.lt.s32.totalorder %v48, 1
  %v50 = vsel %vm49, %v45, %v46
  %v51 = vsel %vm49, %v44, %v45
  %v52 = vsel %vm49, %v43, %v44
  %v53 = vsel %vm49, %v46, %v43
  %55 = vset.pattern.permute.xlu0 0
  %56 = vperm.xlu0 %55, %v27
  %v57 = vpop.permute.xlu0 %56
  %60 = vset.pattern.permute.xlu0 0
  %61 = vperm.xlu0 %60, %v28
  %v62 = vpop.permute.xlu0 %61
  %65 = vset.pattern.permute.xlu0 0
  %66 = vperm.xlu0 %65, %v29
  %v67 = vpop.permute.xlu0 %66
  %70 = vset.pattern.permute.xlu0 0
  %71 = vperm.xlu0 %70, %v30
  %v72 = vpop.permute.xlu0 %71
  %v74 = vmul.f32 %v53, %v57
  %v75 = vmul.f32 %v52, %v62
  %v76 = vmul.f32 %v51, %v67
  %v77 = vmul.f32 %v50, %v72
  %v78 = vrot.slane %v39, 1
  %v79 = vrot.slane %v40, 1
  %v80 = vrot.slane %v41, 1
  %v81 = vrot.slane %v42, 1
  %vm82 = vcmp.lt.s32.totalorder %v48, 7
  %v83 = vsel %vm82, %v80, %v81
  %v84 = vsel %vm82, %v79, %v80
  %v85 = vsel %vm82, %v78, %v79
  %v86 = vsel %vm82, %v81, %v78
  %88 = vset.pattern.permute.xlu0 0
  %89 = vperm.xlu0 %88, %v31
  %v90 = vpop.permute.xlu0 %89
  %93 = vset.pattern.permute.xlu0 0
  %94 = vperm.xlu0 %93, %v32
  %v95 = vpop.permute.xlu0 %94
  %98 = vset.pattern.permute.xlu0 0
  %99 = vperm.xlu0 %98, %v33
  %v100 = vpop.permute.xlu0 %99
  %103 = vset.pattern.permute.xlu0 0
  %104 = vperm.xlu0 %103, %v34
  %v105 = vpop.permute.xlu0 %104
  %v107 = vmul.f32 %v85, %v90
  %v108 = vmul.f32 %v84, %v95
  %v109 = vmul.f32 %v83, %v100
  %v110 = vmul.f32 %v86, %v105
  %111 = vrot.lane.b32.xlu0 %v74, 32
  %v112 = vpop.permute.xlu0 %111
  %113 = vrot.lane.b32.xlu0 %v75, 32
  %v114 = vpop.permute.xlu0 %113
  %115 = vrot.lane.b32.xlu0 %v76, 32
  %v116 = vpop.permute.xlu0 %115
  %117 = vrot.lane.b32.xlu0 %v77, 32
  %v118 = vpop.permute.xlu0 %117
  %v119 = vadd.f32 %v39, %v112
  %v120 = vadd.f32 %v40, %v114
  %v121 = vadd.f32 %v41, %v116
  %v122 = vadd.f32 %v42, %v118
  %123 = vrot.lane.b32.xlu0 %v107, 64
  %v124 = vpop.permute.xlu0 %123
  %125 = vrot.lane.b32.xlu0 %v108, 64
  %v126 = vpop.permute.xlu0 %125
  %127 = vrot.lane.b32.xlu0 %v109, 64
  %v128 = vpop.permute.xlu0 %127
  %129 = vrot.lane.b32.xlu0 %v110, 64
  %v130 = vpop.permute.xlu0 %129
  %v131 = vadd.f32 %v119, %v124
  %v132 = vadd.f32 %v120, %v126
  %v133 = vadd.f32 %v121, %v128
  %v134 = vadd.f32 %v122, %v130
  %v135 = vpack.c.bf16 %v132, %v131
  %v136 = vpack.c.bf16 %v134, %v133
  %v137 = vld [vmem:[%s3] sm:$0xf]
  %v138 = vld [vmem:[%s3 + $0x4] sm:$0xf]
  %v139 = vld [vmem:[%s3 + $0x8] sm:$0xf]
  %v140 = vld [vmem:[%s3 + $0xc] sm:$0xf]
  %v141 = vld [vmem:[%s3 + $0x10] sm:$0xf]
  %v142 = vld [vmem:[%s3 + $0x14] sm:$0xf]
  %v143 = vld [vmem:[%s3 + $0x18] sm:$0xf]
  %v144 = vld [vmem:[%s3 + $0x1c] sm:$0xf]
  %v145 = vld [vmem:[%s3 + $0x20] sm:$0xf]
  %v146 = vld [vmem:[%s3 + $0x24] sm:$0xf]
  %v147 = vld [vmem:[%s3 + $0x28] sm:$0xf]
  %v148 = vld [vmem:[%s3 + $0x2c] sm:$0xf]
  %v149 = vld [vmem:[%s3 + $0x30] sm:$0xf]
  %v150 = vld [vmem:[%s3 + $0x34] sm:$0xf]
  %v151 = vld [vmem:[%s3 + $0x38] sm:$0xf]
  %v152 = vld [vmem:[%s3 + $0x3c] sm:$0xf]
  %v153 = vld [vmem:[%s4] sm:$0x1]
  %v155 = vlaneseq
  %v156 = vshrl.u32 %v155, 7
  %v157 = vsub.s32 0, %v156
  %v158 = vrot.slane %v153, %v157
  %v176 = vunpack.c.l.b16 %v137
  %v177 = vunpack.c.l.b16 %v138
  %v178 = vunpack.c.l.b16 %v139
  %v179 = vunpack.c.l.b16 %v140
  %v180 = vunpack.c.l.b16 %v141
  %v181 = vunpack.c.l.b16 %v142
  %v182 = vunpack.c.l.b16 %v143
  %v183 = vunpack.c.l.b16 %v144
  %v184 = vunpack.c.l.b16 %v145
  %v185 = vunpack.c.l.b16 %v146
  %v186 = vunpack.c.l.b16 %v147
  %v187 = vunpack.c.l.b16 %v148
  %v188 = vunpack.c.l.b16 %v149
  %v189 = vunpack.c.l.b16 %v150
  %v190 = vunpack.c.l.b16 %v151
  %v191 = vunpack.c.l.b16 %v152
  %v192 = vpack.c.b16 %v177, %v176
  %v193 = vpack.c.b16 %v179, %v178
  %v194 = vpack.c.b16 %v181, %v180
  %v195 = vpack.c.b16 %v183, %v182
  %v196 = vpack.c.b16 %v185, %v184
  %v197 = vpack.c.b16 %v187, %v186
  %v198 = vpack.c.b16 %v189, %v188
  %v199 = vpack.c.b16 %v191, %v190
  %208 = vmatprep.subr.bf16.mxu0 0
  %209 = vmatpush1.bf16.msra.mxu0 %v192
  %210 = vmatprep.subr.bf16.mxu0 0
  %211 = vmatpush1.bf16.msra.mxu0 %v193
  %212 = vmatprep.subr.bf16.mxu0 0
  %213 = vmatpush1.bf16.msra.mxu0 %v194
  %214 = vmatprep.subr.bf16.mxu0 0
  %215 = vmatpush1.bf16.msra.mxu0 %v195
  %216 = vmatprep.subr.bf16.mxu0 0
  %217 = vmatpush1.bf16.msra.mxu0 %v196
  %218 = vmatprep.subr.bf16.mxu0 0
  %219 = vmatpush1.bf16.msra.mxu0 %v197
  %220 = vmatprep.subr.bf16.mxu0 0
  %221 = vmatpush1.bf16.msra.mxu0 %v198
  %222 = vmatprep.subr.bf16.mxu0 0
  %223 = vmatpush1.bf16.msra.mxu0 %v199
  %224 = vmatprep.subr.bf16.mxu0 0
  %225 = vmatpush1.bf16.msra.mxu0 0
  %226 = vmatprep.subr.bf16.mxu0 0
  %227 = vmatpush1.bf16.msra.mxu0 0
  %228 = vmatprep.subr.bf16.mxu0 0
  %229 = vmatpush1.bf16.msra.mxu0 0
  %230 = vmatprep.subr.bf16.mxu0 0
  %231 = vmatpush1.bf16.msra.mxu0 0
  %232 = vmatprep.subr.bf16.mxu0 0
  %233 = vmatpush1.bf16.msra.mxu0 0
  %234 = vmatprep.subr.bf16.mxu0 0
  %235 = vmatpush1.bf16.msra.mxu0 0
  %236 = vmatprep.subr.bf16.mxu0 0
  %237 = vmatpush1.bf16.msra.mxu0 0
  %238 = vmatprep.subr.bf16.mxu0 0
  %239 = vmatpush1.bf16.msra.mxu0 0
  %240 = vmatprep.mubr.bf16.mxu0 0
  %241 = vmatmul.mubr.bf16.gmra.mrb[0].mxu0 %v135
  %v242 = vpop.f32.mrb[0].mxu0
  %v243 = vadd.f32 %v158, %v242
  %v244 = vpop.f32.mrb[0].mxu0
  %v245 = vpop.f32.mrb[0].mxu0
  %v246 = vadd.f32 %v158, %v245
  %v247 = vpop.f32.mrb[0].mxu0
  %248 = vmatprep.mubr.bf16.mxu0 0
  %249 = vmatmul.mubr.bf16.gmra.mrb[0].mxu0 %v136
  %v250 = vpop.f32.mrb[0].mxu0
  %v251 = vadd.f32 %v158, %v250
  %v252 = vpop.f32.mrb[0].mxu0
  %v253 = vpop.f32.mrb[0].mxu0
  %v254 = vadd.f32 %v158, %v253
  %v255 = vpop.f32.mrb[0].mxu0
  %256 = vdwg.mxu0
  %v257 = vmax.f32 %v243, 0.0
  %v258 = vmax.f32 %v246, 0.0
  %v259 = vmax.f32 %v251, 0.0
  %v260 = vmax.f32 %v254, 0.0
  %v261 = vpack.c.bf16 %v258, %v257
  %v262 = vpack.c.bf16 %v260, %v259
  %v263 = vld [vmem:[%s5] sm:$0xf]
  %v264 = vld [vmem:[%s5 + $0x4] sm:$0xf]
  %v265 = vld [vmem:[%s5 + $0x8] sm:$0xf]
  %v266 = vld [vmem:[%s5 + $0xc] sm:$0xf]
  %v267 = vld [vmem:[%s5 + $0x10] sm:$0xf]
  %v268 = vld [vmem:[%s5 + $0x14] sm:$0xf]
  %v269 = vld [vmem:[%s5 + $0x18] sm:$0xf]
  %v270 = vld [vmem:[%s5 + $0x1c] sm:$0xf]
  %v271 = vld [vmem:[%s5 + $0x20] sm:$0xf]
  %v272 = vld [vmem:[%s5 + $0x24] sm:$0xf]
  %v273 = vld [vmem:[%s5 + $0x28] sm:$0xf]
  %v274 = vld [vmem:[%s5 + $0x2c] sm:$0xf]
  %v275 = vld [vmem:[%s5 + $0x30] sm:$0xf]
  %v276 = vld [vmem:[%s5 + $0x34] sm:$0xf]
  %v277 = vld [vmem:[%s5 + $0x38] sm:$0xf]
  %v278 = vld [vmem:[%s5 + $0x3c] sm:$0xf]
  %v279 = vld [vmem:[%s6] sm:$0x1]
  %v281 = vlaneseq
  %v282 = vshrl.u32 %v281, 7
  %v283 = vsub.s32 0, %v282
  %v284 = vrot.slane %v279, %v283
  %v302 = vunpack.c.l.b16 %v263
  %v303 = vunpack.c.l.b16 %v264
  %v304 = vunpack.c.l.b16 %v265
  %v305 = vunpack.c.l.b16 %v266
  %v306 = vunpack.c.l.b16 %v267
  %v307 = vunpack.c.l.b16 %v268
  %v308 = vunpack.c.l.b16 %v269
  %v309 = vunpack.c.l.b16 %v270
  %v310 = vunpack.c.l.b16 %v271
  %v311 = vunpack.c.l.b16 %v272
  %v312 = vunpack.c.l.b16 %v273
  %v313 = vunpack.c.l.b16 %v274
  %v314 = vunpack.c.l.b16 %v275
  %v315 = vunpack.c.l.b16 %v276
  %v316 = vunpack.c.l.b16 %v277
  %v317 = vunpack.c.l.b16 %v278
  %v318 = vpack.c.b16 %v303, %v302
  %v319 = vpack.c.b16 %v305, %v304
  %v320 = vpack.c.b16 %v307, %v306
  %v321 = vpack.c.b16 %v309, %v308
  %v322 = vpack.c.b16 %v311, %v310
  %v323 = vpack.c.b16 %v313, %v312
  %v324 = vpack.c.b16 %v315, %v314
  %v325 = vpack.c.b16 %v317, %v316
  %334 = vmatprep.subr.bf16.mxu0 0
  %335 = vmatpush1.bf16.msra.mxu0 %v318
  %336 = vmatprep.subr.bf16.mxu0 0
  %337 = vmatpush1.bf16.msra.mxu0 %v319
  %338 = vmatprep.subr.bf16.mxu0 0
  %339 = vmatpush1.bf16.msra.mxu0 %v320
  %340 = vmatprep.subr.bf16.mxu0 0
  %341 = vmatpush1.bf16.msra.mxu0 %v321
  %342 = vmatprep.subr.bf16.mxu0 0
  %343 = vmatpush1.bf16.msra.mxu0 %v322
  %344 = vmatprep.subr.bf16.mxu0 0
  %345 = vmatpush1.bf16.msra.mxu0 %v323
  %346 = vmatprep.subr.bf16.mxu0 0
  %347 = vmatpush1.bf16.msra.mxu0 %v324
  %348 = vmatprep.subr.bf16.mxu0 0
  %349 = vmatpush1.bf16.msra.mxu0 %v325
  %350 = vmatprep.subr.bf16.mxu0 0
  %351 = vmatpush1.bf16.msra.mxu0 0
  %352 = vmatprep.subr.bf16.mxu0 0
  %353 = vmatpush1.bf16.msra.mxu0 0
  %354 = vmatprep.subr.bf16.mxu0 0
  %355 = vmatpush1.bf16.msra.mxu0 0
  %356 = vmatprep.subr.bf16.mxu0 0
  %357 = vmatpush1.bf16.msra.mxu0 0
  %358 = vmatprep.subr.bf16.mxu0 0
  %359 = vmatpush1.bf16.msra.mxu0 0
  %360 = vmatprep.subr.bf16.mxu0 0
  %361 = vmatpush1.bf16.msra.mxu0 0
  %362 = vmatprep.subr.bf16.mxu0 0
  %363 = vmatpush1.bf16.msra.mxu0 0
  %364 = vmatprep.subr.bf16.mxu0 0
  %365 = vmatpush1.bf16.msra.mxu0 0
  %366 = vmatprep.mubr.bf16.mxu0 0
  %367 = vmatmul.mubr.bf16.gmra.mrb[0].mxu0 %v261
  %v368 = vpop.f32.mrb[0].mxu0
  %v369 = vadd.f32 %v284, %v368
  %v370 = vpop.f32.mrb[0].mxu0
  %v371 = vpop.f32.mrb[0].mxu0
  %v372 = vadd.f32 %v284, %v371
  %v373 = vpop.f32.mrb[0].mxu0
  %374 = vmatprep.mubr.bf16.mxu0 0
  %375 = vmatmul.mubr.bf16.gmra.mrb[0].mxu0 %v262
  %v376 = vpop.f32.mrb[0].mxu0
  %v377 = vadd.f32 %v284, %v376
  %v378 = vpop.f32.mrb[0].mxu0
  %v379 = vpop.f32.mrb[0].mxu0
  %v380 = vadd.f32 %v284, %v379
  %v381 = vpop.f32.mrb[0].mxu0
  %382 = vdwg.mxu0
  %v383 = vadd.f32 %v35, %v369
  %v384 = vadd.f32 %v36, %v372
  %v385 = vadd.f32 %v37, %v377
  %v386 = vadd.f32 %v38, %v380
  %v387 = vmax.f32 %v383, 0.0
  %v388 = vmax.f32 %v384, 0.0
  %v389 = vmax.f32 %v385, 0.0
  %v390 = vmax.f32 %v386, 0.0
  %v391 = vrot.slane %v387, 7
  %v392 = vrot.slane %v388, 7
  %v393 = vrot.slane %v389, 7
  %v394 = vrot.slane %v390, 7
  %v395 = vsel %vm49, %v393, %v394
  %v396 = vsel %vm49, %v392, %v393
  %v397 = vsel %vm49, %v391, %v392
  %v398 = vsel %vm49, %v394, %v391
  %v399 = vmul.f32 %v398, %v57
  %v400 = vmul.f32 %v397, %v62
  %v401 = vmul.f32 %v396, %v67
  %v402 = vmul.f32 %v395, %v72
  %v403 = vrot.slane %v387, 1
  %v404 = vrot.slane %v388, 1
  %v405 = vrot.slane %v389, 1
  %v406 = vrot.slane %v390, 1
  %v407 = vsel %vm82, %v405, %v406
  %v408 = vsel %vm82, %v404, %v405
  %v409 = vsel %vm82, %v403, %v404
  %v410 = vsel %vm82, %v406, %v403
  %v411 = vmul.f32 %v409, %v90
  %v412 = vmul.f32 %v408, %v95
  %v413 = vmul.f32 %v407, %v100
  %v414 = vmul.f32 %v410, %v105
  %415 = vrot.lane.b32.xlu0 %v399, 32
  %v416 = vpop.permute.xlu0 %415
  %417 = vrot.lane.b32.xlu0 %v400, 32
  %v418 = vpop.permute.xlu0 %417
  %419 = vrot.lane.b32.xlu0 %v401, 32
  %v420 = vpop.permute.xlu0 %419
  %421 = vrot.lane.b32.xlu0 %v402, 32
  %v422 = vpop.permute.xlu0 %421
  %v423 = vadd.f32 %v387, %v416
  %v424 = vadd.f32 %v388, %v418
  %v425 = vadd.f32 %v389, %v420
  %v426 = vadd.f32 %v390, %v422
  %427 = vrot.lane.b32.xlu0 %v411, 64
  %v428 = vpop.permute.xlu0 %427
  %429 = vrot.lane.b32.xlu0 %v412, 64
  %v430 = vpop.permute.xlu0 %429
  %431 = vrot.lane.b32.xlu0 %v413, 64
  %v432 = vpop.permute.xlu0 %431
  %433 = vrot.lane.b32.xlu0 %v414, 64
  %v434 = vpop.permute.xlu0 %433
  %v435 = vadd.f32 %v423, %v428
  %v436 = vadd.f32 %v424, %v430
  %v437 = vadd.f32 %v425, %v432
  %v438 = vadd.f32 %v426, %v434
  %v439 = vpack.c.bf16 %v436, %v435
  %v440 = vpack.c.bf16 %v438, %v437
  %s441 = scalar_lea.vmem %s3, 64
  %v442 = vld [vmem:[%s441] sm:$0xf]
  %v443 = vld [vmem:[%s441 + $0x4] sm:$0xf]
  %v444 = vld [vmem:[%s441 + $0x8] sm:$0xf]
  %v445 = vld [vmem:[%s441 + $0xc] sm:$0xf]
  %v446 = vld [vmem:[%s441 + $0x10] sm:$0xf]
  %v447 = vld [vmem:[%s441 + $0x14] sm:$0xf]
  %v448 = vld [vmem:[%s441 + $0x18] sm:$0xf]
  %v449 = vld [vmem:[%s441 + $0x1c] sm:$0xf]
  %v450 = vld [vmem:[%s441 + $0x20] sm:$0xf]
  %v451 = vld [vmem:[%s441 + $0x24] sm:$0xf]
  %v452 = vld [vmem:[%s441 + $0x28] sm:$0xf]
  %v453 = vld [vmem:[%s441 + $0x2c] sm:$0xf]
  %v454 = vld [vmem:[%s441 + $0x30] sm:$0xf]
  %v455 = vld [vmem:[%s441 + $0x34] sm:$0xf]
  %v456 = vld [vmem:[%s441 + $0x38] sm:$0xf]
  %v457 = vld [vmem:[%s441 + $0x3c] sm:$0xf]
  %s458 = scalar_lea.vmem %s4, 1
  %v459 = vld [vmem:[%s458] sm:$0x1]
  %v461 = vlaneseq
  %v462 = vshrl.u32 %v461, 7
  %v463 = vsub.s32 0, %v462
  %v464 = vrot.slane %v459, %v463
  %v482 = vunpack.c.l.b16 %v442
  %v483 = vunpack.c.l.b16 %v443
  %v484 = vunpack.c.l.b16 %v444
  %v485 = vunpack.c.l.b16 %v445
  %v486 = vunpack.c.l.b16 %v446
  %v487 = vunpack.c.l.b16 %v447
  %v488 = vunpack.c.l.b16 %v448
  %v489 = vunpack.c.l.b16 %v449
  %v490 = vunpack.c.l.b16 %v450
  %v491 = vunpack.c.l.b16 %v451
  %v492 = vunpack.c.l.b16 %v452
  %v493 = vunpack.c.l.b16 %v453
  %v494 = vunpack.c.l.b16 %v454
  %v495 = vunpack.c.l.b16 %v455
  %v496 = vunpack.c.l.b16 %v456
  %v497 = vunpack.c.l.b16 %v457
  %v498 = vpack.c.b16 %v483, %v482
  %v499 = vpack.c.b16 %v485, %v484
  %v500 = vpack.c.b16 %v487, %v486
  %v501 = vpack.c.b16 %v489, %v488
  %v502 = vpack.c.b16 %v491, %v490
  %v503 = vpack.c.b16 %v493, %v492
  %v504 = vpack.c.b16 %v495, %v494
  %v505 = vpack.c.b16 %v497, %v496
  %514 = vmatprep.subr.bf16.mxu0 0
  %515 = vmatpush1.bf16.msra.mxu0 %v498
  %516 = vmatprep.subr.bf16.mxu0 0
  %517 = vmatpush1.bf16.msra.mxu0 %v499
  %518 = vmatprep.subr.bf16.mxu0 0
  %519 = vmatpush1.bf16.msra.mxu0 %v500
  %520 = vmatprep.subr.bf16.mxu0 0
  %521 = vmatpush1.bf16.msra.mxu0 %v501
  %522 = vmatprep.subr.bf16.mxu0 0
  %523 = vmatpush1.bf16.msra.mxu0 %v502
  %524 = vmatprep.subr.bf16.mxu0 0
  %525 = vmatpush1.bf16.msra.mxu0 %v503
  %526 = vmatprep.subr.bf16.mxu0 0
  %527 = vmatpush1.bf16.msra.mxu0 %v504
  %528 = vmatprep.subr.bf16.mxu0 0
  %529 = vmatpush1.bf16.msra.mxu0 %v505
  %530 = vmatprep.subr.bf16.mxu0 0
  %531 = vmatpush1.bf16.msra.mxu0 0
  %532 = vmatprep.subr.bf16.mxu0 0
  %533 = vmatpush1.bf16.msra.mxu0 0
  %534 = vmatprep.subr.bf16.mxu0 0
  %535 = vmatpush1.bf16.msra.mxu0 0
  %536 = vmatprep.subr.bf16.mxu0 0
  %537 = vmatpush1.bf16.msra.mxu0 0
  %538 = vmatprep.subr.bf16.mxu0 0
  %539 = vmatpush1.bf16.msra.mxu0 0
  %540 = vmatprep.subr.bf16.mxu0 0
  %541 = vmatpush1.bf16.msra.mxu0 0
  %542 = vmatprep.subr.bf16.mxu0 0
  %543 = vmatpush1.bf16.msra.mxu0 0
  %544 = vmatprep.subr.bf16.mxu0 0
  %545 = vmatpush1.bf16.msra.mxu0 0
  %546 = vmatprep.mubr.bf16.mxu0 0
  %547 = vmatmul.mubr.bf16.gmra.mrb[0].mxu0 %v439
  %v548 = vpop.f32.mrb[0].mxu0
  %v549 = vadd.f32 %v464, %v548
  %v550 = vpop.f32.mrb[0].mxu0
  %v551 = vpop.f32.mrb[0].mxu0
  %v552 = vadd.f32 %v464, %v551
  %v553 = vpop.f32.mrb[0].mxu0
  %554 = vmatprep.mubr.bf16.mxu0 0
  %555 = vmatmul.mubr.bf16.gmra.mrb[0].mxu0 %v440
  %v556 = vpop.f32.mrb[0].mxu0
  %v557 = vadd.f32 %v464, %v556
  %v558 = vpop.f32.mrb[0].mxu0
  %v559 = vpop.f32.mrb[0].mxu0
  %v560 = vadd.f32 %v464, %v559
  %v561 = vpop.f32.mrb[0].mxu0
  %562 = vdwg.mxu0
  %v563 = vmax.f32 %v549, 0.0
  %v564 = vmax.f32 %v552, 0.0
  %v565 = vmax.f32 %v557, 0.0
  %v566 = vmax.f32 %v560, 0.0
  %v567 = vpack.c.bf16 %v564, %v563
  %v568 = vpack.c.bf16 %v566, %v565
  %s569 = scalar_lea.vmem %s5, 64
  %v570 = vld [vmem:[%s569] sm:$0xf]
  %v571 = vld [vmem:[%s569 + $0x4] sm:$0xf]
  %v572 = vld [vmem:[%s569 + $0x8] sm:$0xf]
  %v573 = vld [vmem:[%s569 + $0xc] sm:$0xf]
  %v574 = vld [vmem:[%s569 + $0x10] sm:$0xf]
  %v575 = vld [vmem:[%s569 + $0x14] sm:$0xf]
  %v576 = vld [vmem:[%s569 + $0x18] sm:$0xf]
  %v577 = vld [vmem:[%s569 + $0x1c] sm:$0xf]
  %v578 = vld [vmem:[%s569 + $0x20] sm:$0xf]
  %v579 = vld [vmem:[%s569 + $0x24] sm:$0xf]
  %v580 = vld [vmem:[%s569 + $0x28] sm:$0xf]
  %v581 = vld [vmem:[%s569 + $0x2c] sm:$0xf]
  %v582 = vld [vmem:[%s569 + $0x30] sm:$0xf]
  %v583 = vld [vmem:[%s569 + $0x34] sm:$0xf]
  %v584 = vld [vmem:[%s569 + $0x38] sm:$0xf]
  %v585 = vld [vmem:[%s569 + $0x3c] sm:$0xf]
  %s586 = scalar_lea.vmem %s6, 1
  %v587 = vld [vmem:[%s586] sm:$0x1]
  %v589 = vlaneseq
  %v590 = vshrl.u32 %v589, 7
  %v591 = vsub.s32 0, %v590
  %v592 = vrot.slane %v587, %v591
  %v610 = vunpack.c.l.b16 %v570
  %v611 = vunpack.c.l.b16 %v571
  %v612 = vunpack.c.l.b16 %v572
  %v613 = vunpack.c.l.b16 %v573
  %v614 = vunpack.c.l.b16 %v574
  %v615 = vunpack.c.l.b16 %v575
  %v616 = vunpack.c.l.b16 %v576
  %v617 = vunpack.c.l.b16 %v577
  %v618 = vunpack.c.l.b16 %v578
  %v619 = vunpack.c.l.b16 %v579
  %v620 = vunpack.c.l.b16 %v580
  %v621 = vunpack.c.l.b16 %v581
  %v622 = vunpack.c.l.b16 %v582
  %v623 = vunpack.c.l.b16 %v583
  %v624 = vunpack.c.l.b16 %v584
  %v625 = vunpack.c.l.b16 %v585
  %v626 = vpack.c.b16 %v611, %v610
  %v627 = vpack.c.b16 %v613, %v612
  %v628 = vpack.c.b16 %v615, %v614
  %v629 = vpack.c.b16 %v617, %v616
  %v630 = vpack.c.b16 %v619, %v618
  %v631 = vpack.c.b16 %v621, %v620
  %v632 = vpack.c.b16 %v623, %v622
  %v633 = vpack.c.b16 %v625, %v624
  %642 = vmatprep.subr.bf16.mxu0 0
  %643 = vmatpush1.bf16.msra.mxu0 %v626
  %644 = vmatprep.subr.bf16.mxu0 0
  %645 = vmatpush1.bf16.msra.mxu0 %v627
  %646 = vmatprep.subr.bf16.mxu0 0
  %647 = vmatpush1.bf16.msra.mxu0 %v628
  %648 = vmatprep.subr.bf16.mxu0 0
  %649 = vmatpush1.bf16.msra.mxu0 %v629
  %650 = vmatprep.subr.bf16.mxu0 0
  %651 = vmatpush1.bf16.msra.mxu0 %v630
  %652 = vmatprep.subr.bf16.mxu0 0
  %653 = vmatpush1.bf16.msra.mxu0 %v631
  %654 = vmatprep.subr.bf16.mxu0 0
  %655 = vmatpush1.bf16.msra.mxu0 %v632
  %656 = vmatprep.subr.bf16.mxu0 0
  %657 = vmatpush1.bf16.msra.mxu0 %v633
  %658 = vmatprep.subr.bf16.mxu0 0
  %659 = vmatpush1.bf16.msra.mxu0 0
  %660 = vmatprep.subr.bf16.mxu0 0
  %661 = vmatpush1.bf16.msra.mxu0 0
  %662 = vmatprep.subr.bf16.mxu0 0
  %663 = vmatpush1.bf16.msra.mxu0 0
  %664 = vmatprep.subr.bf16.mxu0 0
  %665 = vmatpush1.bf16.msra.mxu0 0
  %666 = vmatprep.subr.bf16.mxu0 0
  %667 = vmatpush1.bf16.msra.mxu0 0
  %668 = vmatprep.subr.bf16.mxu0 0
  %669 = vmatpush1.bf16.msra.mxu0 0
  %670 = vmatprep.subr.bf16.mxu0 0
  %671 = vmatpush1.bf16.msra.mxu0 0
  %672 = vmatprep.subr.bf16.mxu0 0
  %673 = vmatpush1.bf16.msra.mxu0 0
  %674 = vmatprep.mubr.bf16.mxu0 0
  %675 = vmatmul.mubr.bf16.gmra.mrb[0].mxu0 %v567
  %v676 = vpop.f32.mrb[0].mxu0
  %v677 = vadd.f32 %v592, %v676
  %v678 = vpop.f32.mrb[0].mxu0
  %v679 = vpop.f32.mrb[0].mxu0
  %v680 = vadd.f32 %v592, %v679
  %v681 = vpop.f32.mrb[0].mxu0
  %682 = vmatprep.mubr.bf16.mxu0 0
  %683 = vmatmul.mubr.bf16.gmra.mrb[0].mxu0 %v568
  %v684 = vpop.f32.mrb[0].mxu0
  %v685 = vadd.f32 %v592, %v684
  %v686 = vpop.f32.mrb[0].mxu0
  %v687 = vpop.f32.mrb[0].mxu0
  %v688 = vadd.f32 %v592, %v687
  %v689 = vpop.f32.mrb[0].mxu0
  %690 = vdwg.mxu0
  %v691 = vadd.f32 %v383, %v677
  %v692 = vadd.f32 %v384, %v680
  %v693 = vadd.f32 %v385, %v685
  %v694 = vadd.f32 %v386, %v688
  %v695 = vmax.f32 %v691, 0.0
  %v696 = vmax.f32 %v692, 0.0
  %v697 = vmax.f32 %v693, 0.0
  %v698 = vmax.f32 %v694, 0.0
  %699 = vst [vmem:[%s7] sm:$0xff] %v695
  %700 = vst [vmem:[%s7 + $0x8] sm:$0xff] %v696
  %701 = vst [vmem:[%s7 + $0x10] sm:$0xff] %v697
  %702 = vst [vmem:[%s7 + $0x18] sm:$0xff] %v698
  // Predicated region
  $region30: #{residual_stack_pallas.1} parent=0 // pred_check
    _
  $region31: #{residual_stack_pallas.1} parent=0 // pred_check_branch
    %704 = sbr.rel (0) target = $region33
  $region32: #{residual_stack_pallas.1} parent=0 // pred_region
    _
  $region33: #{residual_stack_pallas.1} parent=0 // pred_fallthru
    _
  // Predicated region
  $region34: #{residual_stack_pallas.1} parent=0 // pred_check
    _
  $region35: #{residual_stack_pallas.1} parent=0 // pred_check_branch
    %706 = sbr.rel (0) target = $region37
  $region36: #{residual_stack_pallas.1} parent=0 // pred_region
    _
  $region37: #{residual_stack_pallas.1} parent=0 // pred_fallthru
    _

</llo_original>
